<compile_context>
chip_gen: v7x
topology: tpu7x:2x2x1
jax: 0.10.0
libtpu: 0.0.40
codegen_flags: <defaults>
</compile_context>

<pallas_src>
import jax
import jax.numpy as jnp
from jax.experimental import pallas as pl
from jax.experimental.pallas import tpu as pltpu

_LANE = 128  # vreg lane width


def _residual_add_kernel(a_ref, b_ref, o_ref):
    # Elementwise add on one (block_rows, 128) lane-dense tile.
    o_ref[...] = a_ref[...] + b_ref[...]


def residual_add(fn_out, x, *, block_rows=2048):
    """Compute fn_out + x with a tiled, pipelined Pallas kernel.

    fn_out, x: arrays of identical shape (any rank).
    block_rows: rows of the (rows, 128) view processed per grid step.
                2048 rows * 128 lanes * 4B = 1 MiB per operand per block, so with
                double buffering of 3 operands this stays ~6 MiB of VMEM —
                comfortably under the 32 MiB scoped limit on v5e/v6e/v7x.
    """
    assert fn_out.shape == x.shape, (fn_out.shape, x.shape)
    out_dtype = jnp.result_type(fn_out.dtype, x.dtype)
    orig_shape = x.shape
    n = x.size

    a = fn_out.astype(out_dtype).reshape(-1)
    b = x.astype(out_dtype).reshape(-1)

    rows = pl.cdiv(n, _LANE)
    if rows <= block_rows:
        # Single block: block shape may equal the full (rows, 128) array, so no
        # (8,128) divisibility requirement.
        tr = rows
        rows_padded = rows
    else:
        # Multiple blocks: block rows must be a multiple of 8 sublanes; pad the
        # row count so the grid tiles exactly (no partial blocks).
        tr = max(8, (block_rows // 8) * 8)
        rows_padded = pl.cdiv(rows, tr) * tr

    padded_n = rows_padded * _LANE
    if padded_n != n:
        pad = padded_n - n
        a = jnp.pad(a, (0, pad))
        b = jnp.pad(b, (0, pad))

    a2 = a.reshape(rows_padded, _LANE)
    b2 = b.reshape(rows_padded, _LANE)

    grid = (rows_padded // tr,)
    out = pl.pallas_call(
        _residual_add_kernel,
        out_shape=jax.ShapeDtypeStruct((rows_padded, _LANE), out_dtype),
        grid=grid,
        in_specs=[
            pl.BlockSpec((tr, _LANE), lambda i: (i, 0)),
            pl.BlockSpec((tr, _LANE), lambda i: (i, 0)),
        ],
        out_specs=pl.BlockSpec((tr, _LANE), lambda i: (i, 0)),
        compiler_params=pltpu.CompilerParams(
            dimension_semantics=("parallel",),
        ),
    )(a2, b2)

    return out.reshape(-1)[:n].reshape(orig_shape)


class ResidualAdd:
    """Mirror of the PyTorch module: forward(x) = fn(x) + x."""

    def __init__(self, fn):
        self.fn = fn

    def __call__(self, x):
        return residual_add(self.fn(x), x)


if __name__ == "__main__":
    # Small shapes consistent with a transformer-block residual:
    # batch=2, seq=8, hidden=32.
    B, S, H = 2, 8, 32
    FF = 64

    key = jax.random.PRNGKey(0)
    kx, k1, k2 = jax.random.split(key, 3)

    x = jax.random.normal(kx, (B, S, H), dtype=jnp.float32)

    # Deterministic stand-in for the wrapped sub-module: a tiny feed-forward.
    w1 = jax.random.normal(k1, (H, FF), dtype=jnp.float32) * 0.05
    w2 = jax.random.normal(k2, (FF, H), dtype=jnp.float32) * 0.05

    def fn(t):
        return jax.nn.gelu(t @ w1) @ w2

    block = ResidualAdd(fn)
    out = jax.block_until_ready(block(x))

    ref = fn(x) + x

    assert out.shape == x.shape
    assert jnp.allclose(out, ref, atol=1e-5, rtol=1e-5)
    print("KERNEL_OK")
</pallas_src>

<mosaic_0001>
module attributes {stable_mosaic.version = 11 : i64} {
  func.func @_residual_add_kernel(%arg0: i32, %arg1: memref<4x128xf32, #tpu.memory_space<vmem>>, %arg2: memref<4x128xf32, #tpu.memory_space<vmem>>, %arg3: memref<4x128xf32, #tpu.memory_space<vmem>>) attributes {dimension_semantics = [#tpu.dimension_semantics<parallel>], iteration_bounds = array<i64: 1>, scalar_prefetch = 0 : i64, scratch_operands = 0 : i64, tpu.core_type = #tpu.core_type<tc>, window_params = [{transform_indices = @transform_0, window_bounds = array<i64: 4, 128>}, {transform_indices = @transform_1, window_bounds = array<i64: 4, 128>}, {transform_indices = @transform_2, window_bounds = array<i64: 4, 128>}]} {
    %c0 = arith.constant 0 : index
    %c0_0 = arith.constant 0 : index
    %0 = vector.load %arg1[%c0, %c0_0] : memref<4x128xf32, #tpu.memory_space<vmem>>, vector<4x128xf32>
    %c0_1 = arith.constant 0 : index
    %c0_2 = arith.constant 0 : index
    %1 = vector.load %arg2[%c0_1, %c0_2] : memref<4x128xf32, #tpu.memory_space<vmem>>, vector<4x128xf32>
    %2 = arith.addf %0, %1 : vector<4x128xf32>
    %c0_3 = arith.constant 0 : index
    %c0_4 = arith.constant 0 : index
    %3 = vector.load %arg3[%c0_3, %c0_4] : memref<4x128xf32, #tpu.memory_space<vmem>>, vector<4x128xf32>
    tpu.vector_store %arg3[%c0_3, %c0_4], %2 {strides = array<i32>} : memref<4x128xf32, #tpu.memory_space<vmem>>, vector<4x128xf32>,
    return
  }
  func.func @transform_0(%arg0: i32) -> (i32, i32) {
    %c0_i32 = arith.constant 0 : i32
    %c0_i32_0 = arith.constant 0 : i32
    return %arg0, %c0_i32 : i32, i32
  }
  func.func @transform_1(%arg0: i32) -> (i32, i32) {
    %c0_i32 = arith.constant 0 : i32
    %c0_i32_0 = arith.constant 0 : i32
    return %arg0, %c0_i32 : i32, i32
  }
  func.func @transform_2(%arg0: i32) -> (i32, i32) {
    %c0_i32 = arith.constant 0 : i32
    %c0_i32_0 = arith.constant 0 : i32
    return %arg0, %c0_i32 : i32, i32
  }
}

</mosaic_0001>

<llo_original>
// kernel: tpu_custom_call.1
$region0: #{tpu_custom_call.1}
  #allocation0 [shape = 'u32[]', space=smem, size = 0x4, offset = 0x4, fixed_abs, tag = 'smem constant byte address 0x4 - core index']
  #allocation1 [shape = 'u32[144,128]{1,0:T(1,128)}', space=vmem, size = 0x12000, scoped, tag = 'internal scratch']
  %s0 = inlined_call_operand.hbm [shape: f32[4,128], index: 0, kind: input, shape index: {}]
  %s1 = inlined_call_operand.hbm [shape: f32[4,128], index: 1, kind: input, shape index: {}]
  %s2 = inlined_call_operand.hbm [shape: f32[4,128], index: 2, kind: output, shape index: {}]
  %s3 = sld [smem:[#allocation0]]
  $region26: #{tpu_custom_call.1} parent=0
    _
  %s5 = ssub.s32 1, %s3
  %s6 = scalar_select 0, %s5, %s3
  $region1: #{tpu_custom_call.1} parent=0
    #allocation2 [shape = 'u8[2048]{0}', space=vmem, size = 0x800, scoped, tag = 'input window, operand 0, single buffered']
    #allocation3 [shape = 's32[1]{0}', space=sflag, size = 0x4, scoped, tag = 'scoped memory for tpu_custom_call.1']
    #allocation4 [shape = 's32[1]{0}', space=sflag, size = 0x4, scoped, tag = 'scoped memory for tpu_custom_call.1']
    #allocation5 [shape = 'u8[2048]{0}', space=vmem, size = 0x800, scoped, tag = 'input window, operand 1, single buffered']
    #allocation6 [shape = 's32[1]{0}', space=sflag, size = 0x4, scoped, tag = 'scoped memory for tpu_custom_call.1']
    #allocation7 [shape = 'u8[2048]{0}', space=vmem, size = 0x800, scoped, tag = 'output window, operand 0, single buffered']
    %7 = vsyncpa [#allocation3], 0
    %8 = vsyncpa [#allocation6], 0
    %9 = vsyncpa [#allocation4], 0
    // Predicated region
    $region2: #{tpu_custom_call.1} parent=1 // pred_check
      _
    $region3: #{tpu_custom_call.1} parent=1 // pred_check_branch
      %11 = sbr.rel (0) target = $region5
    $region4: #{tpu_custom_call.1} parent=1 // pred_region
      %s13 = ssub.s32 64, 64
      %14 = vsyncadd [#allocation3], %s13
      %s16 = sshll.u32 [#allocation2], 4
      %s17 = int_to_ptr.vmem [resolvable:$true] %s16
      %19 = dma.hbm_to_vmem [thread:$0]  %s0, 64, %s17, [#allocation3]
    $region5: #{tpu_custom_call.1} parent=1 // pred_fallthru
      _
    // Predicated region
    $region6: #{tpu_custom_call.1} parent=1 // pred_check
      _
    $region7: #{tpu_custom_call.1} parent=1 // pred_check_branch
      %21 = sbr.rel (0) target = $region9
    $region8: #{tpu_custom_call.1} parent=1 // pred_region
      %s23 = ssub.s32 64, 64
      %24 = vsyncadd [#allocation6], %s23
      %s26 = sshll.u32 [#allocation5], 4
      %s27 = int_to_ptr.vmem [resolvable:$true] %s26
      %29 = dma.hbm_to_vmem [thread:$0]  %s1, 64, %s27, [#allocation6]
    $region9: #{tpu_custom_call.1} parent=1 // pred_fallthru
      _
    // Predicated region
    $region10: #{tpu_custom_call.1} parent=1 // pred_check
      _
    $region11: #{tpu_custom_call.1} parent=1 // pred_check_branch
      %31 = sbr.rel (0) target = $region13
    $region12: #{tpu_custom_call.1} parent=1 // pred_region
      %32 = dma.done [#allocation3], 64
    $region13: #{tpu_custom_call.1} parent=1 // pred_fallthru
      _
    // Predicated region
    $region14: #{tpu_custom_call.1} parent=1 // pred_check
      _
    $region15: #{tpu_custom_call.1} parent=1 // pred_check_branch
      %34 = sbr.rel (0) target = $region17
    $region16: #{tpu_custom_call.1} parent=1 // pred_region
      %35 = dma.done [#allocation6], 64
    $region17: #{tpu_custom_call.1} parent=1 // pred_fallthru
      _
    %v36 = vld [vmem:[#allocation2] sm:$0xf]
    %v37 = vld [vmem:[#allocation5] sm:$0xf]
    %v38 = vadd.f32 %v36, %v37
    %39 = vst [vmem:[#allocation7] sm:$0xf] %v38
    // Predicated region
    $region18: #{tpu_custom_call.1} parent=1 // pred_check
      _
    $region19: #{tpu_custom_call.1} parent=1 // pred_check_branch
      %41 = sbr.rel (0) target = $region21
    $region20: #{tpu_custom_call.1} parent=1 // pred_region
      %s43 = ssub.s32 64, 64
      %44 = vsyncadd [#allocation4], %s43
      %s46 = sshll.u32 [#allocation7], 4
      %s47 = int_to_ptr.vmem [resolvable:$true] %s46
      %49 = dma.vmem_to_hbm [thread:$0]  %s47, 64, %s2, [#allocation4]
    $region21: #{tpu_custom_call.1} parent=1 // pred_fallthru
      _
    // Predicated region
    $region22: #{tpu_custom_call.1} parent=1 // pred_check
      _
    $region23: #{tpu_custom_call.1} parent=1 // pred_check_branch
      %51 = sbr.rel (0) target = $region25
    $region24: #{tpu_custom_call.1} parent=1 // pred_region
      %52 = dma.done [#allocation4], 64
    $region25: #{tpu_custom_call.1} parent=1 // pred_fallthru
      _
    %53 = vsyncpa [#allocation3], 1
    %54 = vsyncpa [#allocation6], 1
    %55 = vsyncpa [#allocation4], 1

</llo_original>
